<compile_context>
chip_gen: v5e
topology: v5e:2x2
jax: 0.10.0
libtpu: 0.0.40
codegen_flags: <defaults>
</compile_context>

<pallas_src>
import numpy as np
import jax
import jax.numpy as jnp
from jax.experimental import pallas as pl
from jax.experimental.pallas import tpu as pltpu


def _round_up(x, m):
    return (x + m - 1) // m * m


# --------------------------------------------------------------------------- kernel
def _decoder_kernel(z_ref, w1_ref, b1_ref, w2_ref, b2_ref,
                    w3_ref, b3_ref, w4_ref, b4_ref, out_ref):
    # Layer 0: Linear + ReLU.  Columns are time-major (col = t*64 + c).
    h = jnp.dot(z_ref[...], w1_ref[...], preferred_element_type=jnp.float32)
    h = jnp.maximum(h + b1_ref[...], 0.0)

    # Layers 1-2: banded ConvTranspose1d + ReLU (time stacked in K, lane-dense N).
    h = jnp.dot(h.astype(w2_ref.dtype), w2_ref[...],
                preferred_element_type=jnp.float32)
    h = jnp.maximum(h + b2_ref[...], 0.0)

    h = jnp.dot(h.astype(w3_ref.dtype), w3_ref[...],
                preferred_element_type=jnp.float32)
    h = jnp.maximum(h + b3_ref[...], 0.0)

    # Layer 3: banded ConvTranspose1d + Tanh; output columns zero-padded to a
    # multiple of 128 so this is a single unmasked lane-dense store.
    h = jnp.dot(h.astype(w4_ref.dtype), w4_ref[...],
                preferred_element_type=jnp.float32)
    out_ref[...] = jnp.tanh(h + b4_ref[...])


# ------------------------------------------------------------------- weight packing
def pack_ecg_decoder_params(params, compute_dtype=jnp.bfloat16):
    """Pack PyTorch-layout parameters ONCE (host side, outside jit).

    params = ((w1_t, b1), (w2, b2), (w3, b3), (w4, b4)):
      w1_t : (64*seq//8, E) Linear weight (out, in),  b1: (64*seq//8,)
      wK   : (Cin, Cout, 3) ConvTranspose1d weights,  bK: (Cout,)

    Weights are returned in `compute_dtype` (bf16 by default -> MXU-native on
    v6e/v7x); biases stay f32 so elementwise math stays f32.
    """
    (w1_t, b1), (w2, b2), (w3, b3), (w4, b4) = params
    out_feat, E = w1_t.shape
    l8 = out_feat // 64
    C = w4.shape[1]
    S = 8 * l8

    # Linear weight/bias with time-major columns: col t*64 + c  <->  Linear row c*l8 + t
    w1_np = np.asarray(w1_t, np.float32)
    w1k = w1_np.T.reshape(E, 64, l8).transpose(0, 2, 1).reshape(E, 64 * l8)
    b1k = np.asarray(b1, np.float32).reshape(64, l8).T.reshape(1, 64 * l8)

    def banded(W, b, L_in):
        # ConvTranspose1d(k=3,s=2,p=1,op=1) as a banded (L_in*Cin, 2*L_in*Cout) matrix,
        # rows/cols time-major (row j*Cin + cin, col t*Cout + cout).
        W = np.asarray(W, np.float32)
        b = np.asarray(b, np.float32)
        Cin, Cout, _ = W.shape
        L_out = 2 * L_in
        Wb = np.zeros((L_in * Cin, L_out * Cout), np.float32)
        for j in range(L_in):
            # out[2j]   = x[j]   @ W[:,:,1]
            Wb[j * Cin:(j + 1) * Cin, (2 * j) * Cout:(2 * j + 1) * Cout] = W[:, :, 1]
            # out[2j+1] = x[j]   @ W[:,:,2]  (+ x[j+1] @ W[:,:,0])
            Wb[j * Cin:(j + 1) * Cin, (2 * j + 1) * Cout:(2 * j + 2) * Cout] = W[:, :, 2]
            if j + 1 < L_in:
                Wb[(j + 1) * Cin:(j + 2) * Cin,
                   (2 * j + 1) * Cout:(2 * j + 2) * Cout] = W[:, :, 0]
        bb = np.tile(b, L_out).reshape(1, L_out * Cout)
        return Wb, bb

    w2k, b2k = banded(w2, b2, l8)
    w3k, b3k = banded(w3, b3, 2 * l8)
    w4k, b4k = banded(w4, b4, 4 * l8)

    # Pad the final output columns to a multiple of 128 -> lane-dense store.
    n_out = S * C
    n_pad = _round_up(n_out, 128)
    if n_pad != n_out:
        w4k = np.pad(w4k, ((0, 0), (0, n_pad - n_out)))
        b4k = np.pad(b4k, ((0, 0), (0, n_pad - n_out)))

    cd = compute_dtype
    return dict(
        w1=jnp.asarray(w1k, cd), b1=jnp.asarray(b1k, jnp.float32),
        w2=jnp.asarray(w2k, cd), b2=jnp.asarray(b2k, jnp.float32),
        w3=jnp.asarray(w3k, cd), b3=jnp.asarray(b3k, jnp.float32),
        w4=jnp.asarray(w4k, cd), b4=jnp.asarray(b4k, jnp.float32),
        meta=(E, S, C, n_pad),
    )


# ------------------------------------------------------------------------- forward
def ecg_decoder_forward(z, packed, *, block_b_max=512):
    """z: (B, E) f32.  Returns (B, channels, seq_length) like the PyTorch module."""
    E, S, C, n_pad = packed["meta"]
    B = z.shape[0]
    assert z.shape[1] == E
    assert block_b_max % 8 == 0, "block_b_max must be a multiple of the sublane tile (8)"

    cd = packed["w1"].dtype
    zc = z.astype(cd)

    # Batch tiling: pad to the sublane tile, cap at block_b_max, and split into
    # >=2 grid steps when possible so v7x's two TensorCores both get work.
    bp8 = _round_up(B, 8)
    block_b = min(bp8, block_b_max)
    if bp8 // 2 >= 8:
        block_b = min(block_b, _round_up(bp8 // 2, 8))
    b_pad = _round_up(B, block_b)
    if b_pad != B:
        zc = jnp.pad(zc, ((0, b_pad - B), (0, 0)))

    const2 = lambda i: (0, 0)
    names = ("w1", "b1", "w2", "b2", "w3", "b3", "w4", "b4")
    w_args = [packed[n] for n in names]
    w_specs = [pl.BlockSpec(a.shape, const2) for a in w_args]

    flat = pl.pallas_call(
        _decoder_kernel,
        out_shape=jax.ShapeDtypeStruct((b_pad, n_pad), jnp.float32),
        grid=(b_pad // block_b,),
        in_specs=[pl.BlockSpec((block_b, E), lambda i: (i, 0))] + w_specs,
        out_specs=pl.BlockSpec((block_b, n_pad), lambda i: (i, 0)),
        compiler_params=pltpu.CompilerParams(
            dimension_semantics=("parallel",)),
    )(zc, *w_args)

    # (b_pad, n_pad) -> (B, S, C) -> PyTorch NCW (B, C, S); drop padded rows/lanes.
    return flat[:B, :S * C].reshape(B, S, C).transpose(0, 2, 1)


# ----------------------------------------------------------------------- reference
def ecg_decoder_reference(z, params):
    """Pure-JAX f32 reference mirroring the PyTorch module exactly (NCW output)."""
    (w1_t, b1), *convs = params
    B = z.shape[0]
    l8 = w1_t.shape[0] // 64
    h = jnp.maximum(z @ w1_t.T + b1, 0.0)            # Linear + ReLU
    x = h.reshape(B, 64, l8)                         # Unflatten -> (B, 64, L8)
    for idx, (W, b) in enumerate(convs):
        Cin, Co, K = W.shape
        Li = x.shape[2]
        Lo = 2 * Li
        y = jnp.zeros((B, Co, Lo), jnp.float32)
        for i in range(Li):
            for k in range(K):
                t = 2 * i - 1 + k
                if 0 <= t < Lo:
                    y = y.at[:, :, t].add(x[:, :, i] @ W[:, :, k])
        y = y + b[None, :, None]
        x = jnp.maximum(y, 0.0) if idx < 2 else jnp.tanh(y)
    return x


# ----------------------------------------------------------------------------- main
if __name__ == "__main__":
    # Small, module-consistent shapes.
    embedding_size = 32
    channels, seq_length = 4, 16          # input_size = (channels, seq_length)
    L8 = seq_length // 8

    key = jax.random.PRNGKey(0)
    ks = jax.random.split(key, 10)
    f32 = jnp.float32

    w1_t = 0.1 * jax.random.normal(ks[0], (64 * L8, embedding_size), f32)
    b1 = 0.1 * jax.random.normal(ks[1], (64 * L8,), f32)
    w2 = 0.1 * jax.random.normal(ks[2], (64, 32, 3), f32)
    b2 = 0.1 * jax.random.normal(ks[3], (32,), f32)
    w3 = 0.1 * jax.random.normal(ks[4], (32, 16, 3), f32)
    b3 = 0.1 * jax.random.normal(ks[5], (16,), f32)
    w4 = 0.1 * jax.random.normal(ks[6], (16, channels, 3), f32)
    b4 = 0.1 * jax.random.normal(ks[7], (channels,), f32)
    params = ((w1_t, b1), (w2, b2), (w3, b3), (w4, b4))

    # Pack once (hoisted out of the traced forward path).
    packed_f32 = pack_ecg_decoder_params(params, compute_dtype=jnp.float32)
    packed_bf16 = pack_ecg_decoder_params(params, compute_dtype=jnp.bfloat16)

    # --- tight check in f32 (single grid step, B=2) ---
    B = 2
    z = jax.random.normal(ks[8], (B, embedding_size), f32)
    out = jax.block_until_ready(ecg_decoder_forward(z, packed_f32))
    ref = jax.block_until_ready(ecg_decoder_reference(z, params))
    assert out.shape == (B, channels, seq_length), out.shape
    np.testing.assert_allclose(np.asarray(out), np.asarray(ref),
                               rtol=1e-4, atol=1e-5)

    # --- multi-step grid (batch padding + "parallel" sharding) + bf16 MXU path ---
    B2 = 19
    z2 = jax.random.normal(ks[9], (B2, embedding_size), f32)
    ref2 = jax.block_until_ready(ecg_decoder_reference(z2, params))

    out2_f32 = jax.block_until_ready(ecg_decoder_forward(z2, packed_f32))
    np.testing.assert_allclose(np.asarray(out2_f32), np.asarray(ref2),
                               rtol=1e-4, atol=1e-5)

    out2_bf16 = jax.block_until_ready(ecg_decoder_forward(z2, packed_bf16))
    np.testing.assert_allclose(np.asarray(out2_bf16), np.asarray(ref2),
                               rtol=5e-2, atol=5e-2)

    print("KERNEL_OK")
</pallas_src>

<mosaic_0001>
module attributes {stable_mosaic.version = 11 : i64} {
  func.func @_decoder_kernel(%arg0: i32, %arg1: memref<8x32xf32, #tpu.memory_space<vmem>>, %arg2: memref<32x128xf32, #tpu.memory_space<vmem>>, %arg3: memref<1x128xf32, #tpu.memory_space<vmem>>, %arg4: memref<128x128xf32, #tpu.memory_space<vmem>>, %arg5: memref<1x128xf32, #tpu.memory_space<vmem>>, %arg6: memref<128x128xf32, #tpu.memory_space<vmem>>, %arg7: memref<1x128xf32, #tpu.memory_space<vmem>>, %arg8: memref<128x128xf32, #tpu.memory_space<vmem>>, %arg9: memref<1x128xf32, #tpu.memory_space<vmem>>, %arg10: memref<8x128xf32, #tpu.memory_space<vmem>>) attributes {dimension_semantics = [#tpu.dimension_semantics<parallel>], iteration_bounds = array<i64: 1>, scalar_prefetch = 0 : i64, scratch_operands = 0 : i64, tpu.core_type = #tpu.core_type<tc>, window_params = [{transform_indices = @transform_0, window_bounds = array<i64: 8, 32>}, {pipeline_mode = #tpu.pipeline_mode<synchronous>, transform_indices = @transform_1, window_bounds = array<i64: 32, 128>}, {pipeline_mode = #tpu.pipeline_mode<synchronous>, transform_indices = @transform_2, window_bounds = array<i64: 1, 128>}, {pipeline_mode = #tpu.pipeline_mode<synchronous>, transform_indices = @transform_3, window_bounds = array<i64: 128, 128>}, {pipeline_mode = #tpu.pipeline_mode<synchronous>, transform_indices = @transform_4, window_bounds = array<i64: 1, 128>}, {pipeline_mode = #tpu.pipeline_mode<synchronous>, transform_indices = @transform_5, window_bounds = array<i64: 128, 128>}, {pipeline_mode = #tpu.pipeline_mode<synchronous>, transform_indices = @transform_6, window_bounds = array<i64: 1, 128>}, {pipeline_mode = #tpu.pipeline_mode<synchronous>, transform_indices = @transform_7, window_bounds = array<i64: 128, 128>}, {pipeline_mode = #tpu.pipeline_mode<synchronous>, transform_indices = @transform_8, window_bounds = array<i64: 1, 128>}, {transform_indices = @transform_9, window_bounds = array<i64: 8, 128>}]} {
    %c0 = arith.constant 0 : index
    %c0_0 = arith.constant 0 : index
    %0 = vector.load %arg1[%c0, %c0_0] : memref<8x32xf32, #tpu.memory_space<vmem>>, vector<8x32xf32>
    %c0_1 = arith.constant 0 : index
    %c0_2 = arith.constant 0 : index
    %1 = vector.load %arg2[%c0_1, %c0_2] : memref<32x128xf32, #tpu.memory_space<vmem>>, vector<32x128xf32>
    %cst = arith.constant dense<0.000000e+00> : vector<8x128xf32>
    %2 = tpu.matmul %0, %1, %cst {dimension_numbers = #tpu.dot_dimension_numbers<[1], [0], [0], [1], [0, 0, 1, 1], [], []>} : vector<8x32xf32>, vector<32x128xf32>, vector<8x128xf32> -> vector<8x128xf32>
    %c0_3 = arith.constant 0 : index
    %c0_4 = arith.constant 0 : index
    %3 = vector.load %arg3[%c0_3, %c0_4] : memref<1x128xf32, #tpu.memory_space<vmem>>, vector<1x128xf32>
    %4 = vector.broadcast %3 : vector<1x128xf32> to vector<8x128xf32>
    %5 = arith.addf %2, %4 : vector<8x128xf32>
    %cst_5 = arith.constant 0.000000e+00 : f32
    %6 = vector.broadcast %cst_5 : f32 to vector<8x128xf32>
    %7 = arith.maximumf %5, %6 : vector<8x128xf32>
    %c0_6 = arith.constant 0 : index
    %c0_7 = arith.constant 0 : index
    %8 = vector.load %arg4[%c0_6, %c0_7] : memref<128x128xf32, #tpu.memory_space<vmem>>, vector<128x128xf32>
    %cst_8 = arith.constant dense<0.000000e+00> : vector<8x128xf32>
    %9 = tpu.matmul %7, %8, %cst_8 {dimension_numbers = #tpu.dot_dimension_numbers<[1], [0], [0], [1], [0, 0, 1, 1], [], []>} : vector<8x128xf32>, vector<128x128xf32>, vector<8x128xf32> -> vector<8x128xf32>
    %c0_9 = arith.constant 0 : index
    %c0_10 = arith.constant 0 : index
    %10 = vector.load %arg5[%c0_9, %c0_10] : memref<1x128xf32, #tpu.memory_space<vmem>>, vector<1x128xf32>
    %11 = vector.broadcast %10 : vector<1x128xf32> to vector<8x128xf32>
    %12 = arith.addf %9, %11 : vector<8x128xf32>
    %cst_11 = arith.constant 0.000000e+00 : f32
    %13 = vector.broadcast %cst_11 : f32 to vector<8x128xf32>
    %14 = arith.maximumf %12, %13 : vector<8x128xf32>
    %c0_12 = arith.constant 0 : index
    %c0_13 = arith.constant 0 : index
    %15 = vector.load %arg6[%c0_12, %c0_13] : memref<128x128xf32, #tpu.memory_space<vmem>>, vector<128x128xf32>
    %cst_14 = arith.constant dense<0.000000e+00> : vector<8x128xf32>
    %16 = tpu.matmul %14, %15, %cst_14 {dimension_numbers = #tpu.dot_dimension_numbers<[1], [0], [0], [1], [0, 0, 1, 1], [], []>} : vector<8x128xf32>, vector<128x128xf32>, vector<8x128xf32> -> vector<8x128xf32>
    %c0_15 = arith.constant 0 : index
    %c0_16 = arith.constant 0 : index
    %17 = vector.load %arg7[%c0_15, %c0_16] : memref<1x128xf32, #tpu.memory_space<vmem>>, vector<1x128xf32>
    %18 = vector.broadcast %17 : vector<1x128xf32> to vector<8x128xf32>
    %19 = arith.addf %16, %18 : vector<8x128xf32>
    %cst_17 = arith.constant 0.000000e+00 : f32
    %20 = vector.broadcast %cst_17 : f32 to vector<8x128xf32>
    %21 = arith.maximumf %19, %20 : vector<8x128xf32>
    %c0_18 = arith.constant 0 : index
    %c0_19 = arith.constant 0 : index
    %22 = vector.load %arg8[%c0_18, %c0_19] : memref<128x128xf32, #tpu.memory_space<vmem>>, vector<128x128xf32>
    %cst_20 = arith.constant dense<0.000000e+00> : vector<8x128xf32>
    %23 = tpu.matmul %21, %22, %cst_20 {dimension_numbers = #tpu.dot_dimension_numbers<[1], [0], [0], [1], [0, 0, 1, 1], [], []>} : vector<8x128xf32>, vector<128x128xf32>, vector<8x128xf32> -> vector<8x128xf32>
    %c0_21 = arith.constant 0 : index
    %c0_22 = arith.constant 0 : index
    %24 = vector.load %arg9[%c0_21, %c0_22] : memref<1x128xf32, #tpu.memory_space<vmem>>, vector<1x128xf32>
    %25 = vector.broadcast %24 : vector<1x128xf32> to vector<8x128xf32>
    %26 = arith.addf %23, %25 : vector<8x128xf32>
    %27 = math.tanh %26 : vector<8x128xf32>
    %c0_23 = arith.constant 0 : index
    %c0_24 = arith.constant 0 : index
    %28 = vector.load %arg10[%c0_23, %c0_24] : memref<8x128xf32, #tpu.memory_space<vmem>>, vector<8x128xf32>
    tpu.vector_store %arg10[%c0_23, %c0_24], %27 {strides = array<i32>} : memref<8x128xf32, #tpu.memory_space<vmem>>, vector<8x128xf32>,
    return
  }
  func.func @transform_0(%arg0: i32) -> (i32, i32) {
    %c0_i32 = arith.constant 0 : i32
    %c0_i32_0 = arith.constant 0 : i32
    return %arg0, %c0_i32 : i32, i32
  }
  func.func @transform_1(%arg0: i32) -> (i32, i32) {
    %c0_i32 = arith.constant 0 : i32
    %c0_i32_0 = arith.constant 0 : i32
    %c0_i32_1 = arith.constant 0 : i32
    return %c0_i32, %c0_i32_0 : i32, i32
  }
  func.func @transform_2(%arg0: i32) -> (i32, i32) {
    %c0_i32 = arith.constant 0 : i32
    %c0_i32_0 = arith.constant 0 : i32
    %c0_i32_1 = arith.constant 0 : i32
    return %c0_i32, %c0_i32_0 : i32, i32
  }
  func.func @transform_3(%arg0: i32) -> (i32, i32) {
    %c0_i32 = arith.constant 0 : i32
    %c0_i32_0 = arith.constant 0 : i32
    %c0_i32_1 = arith.constant 0 : i32
    return %c0_i32, %c0_i32_0 : i32, i32
  }
  func.func @transform_4(%arg0: i32) -> (i32, i32) {
    %c0_i32 = arith.constant 0 : i32
    %c0_i32_0 = arith.constant 0 : i32
    %c0_i32_1 = arith.constant 0 : i32
    return %c0_i32, %c0_i32_0 : i32, i32
  }
  func.func @transform_5(%arg0: i32) -> (i32, i32) {
    %c0_i32 = arith.constant 0 : i32
    %c0_i32_0 = arith.constant 0 : i32
    %c0_i32_1 = arith.constant 0 : i32
    return %c0_i32, %c0_i32_0 : i32, i32
  }
  func.func @transform_6(%arg0: i32) -> (i32, i32) {
    %c0_i32 = arith.constant 0 : i32
    %c0_i32_0 = arith.constant 0 : i32
    %c0_i32_1 = arith.constant 0 : i32
    return %c0_i32, %c0_i32_0 : i32, i32
  }
  func.func @transform_7(%arg0: i32) -> (i32, i32) {
    %c0_i32 = arith.constant 0 : i32
    %c0_i32_0 = arith.constant 0 : i32
    %c0_i32_1 = arith.constant 0 : i32
    return %c0_i32, %c0_i32_0 : i32, i32
  }
  func.func @transform_8(%arg0: i32) -> (i32, i32) {
    %c0_i32 = arith.constant 0 : i32
    %c0_i32_0 = arith.constant 0 : i32
    %c0_i32_1 = arith.constant 0 : i32
    return %c0_i32, %c0_i32_0 : i32, i32
  }
  func.func @transform_9(%arg0: i32) -> (i32, i32) {
    %c0_i32 = arith.constant 0 : i32
    %c0_i32_0 = arith.constant 0 : i32
    return %arg0, %c0_i32 : i32, i32
  }
}

</mosaic_0001>

<llo_original>
// kernel: tpu_custom_call.1
$region0: #{tpu_custom_call.1}
  #allocation0 [shape = 'u32[]', space=smem, size = 0x4, offset = 0x4, fixed_abs, tag = 'smem constant byte address 0x4 - core index']
  #allocation1 [shape = 'u32[72,128]{1,0:T(1,128)}', space=vmem, size = 0x9000, scoped, tag = 'internal scratch']
  %s0 = inlined_call_operand.hbm [shape: f32[8,32], index: 0, kind: input, shape index: {}]
  %s1 = inlined_call_operand.hbm [shape: f32[32,128], index: 1, kind: input, shape index: {}]
  %s2 = inlined_call_operand.vmem [shape: f32[1,128], index: 2, kind: input, shape index: {}]
  %s3 = inlined_call_operand.hbm [shape: f32[128,128], index: 3, kind: input, shape index: {}]
  %s4 = inlined_call_operand.vmem [shape: f32[1,128], index: 4, kind: input, shape index: {}]
  %s5 = inlined_call_operand.hbm [shape: f32[128,128], index: 5, kind: input, shape index: {}]
  %s6 = inlined_call_operand.vmem [shape: f32[1,128], index: 6, kind: input, shape index: {}]
  %s7 = inlined_call_operand.hbm [shape: f32[128,128], index: 7, kind: input, shape index: {}]
  %s8 = inlined_call_operand.vmem [shape: f32[1,128], index: 8, kind: input, shape index: {}]
  %s9 = inlined_call_operand.hbm [shape: f32[8,128], index: 9, kind: output, shape index: {}]
  %s10 = sld [smem:[#allocation0]]
  $region66: #{tpu_custom_call.1} parent=0
    _
  %s12 = ssub.s32 1, %s10
  %s13 = scalar_select 0, %s12, %s10
  $region1: #{tpu_custom_call.1} parent=0
    #allocation2 [shape = 'u8[4096]{0}', space=vmem, size = 0x1000, scoped, tag = 'input window, operand 0, single buffered']
    #allocation3 [shape = 's32[1]{0}', space=sflag, size = 0x4, scoped, tag = 'scoped memory for tpu_custom_call.1']
    #allocation4 [shape = 's32[1]{0}', space=sflag, size = 0x4, scoped, tag = 'scoped memory for tpu_custom_call.1']
    #allocation5 [shape = 'u8[16384]{0}', space=vmem, size = 0x4000, scoped, tag = 'input window, operand 1, single buffered']
    #allocation6 [shape = 's32[1]{0}', space=sflag, size = 0x4, scoped, tag = 'scoped memory for tpu_custom_call.1']
    #allocation7 [shape = 'u8[65536]{0}', space=vmem, size = 0x10000, scoped, tag = 'input window, operand 3, single buffered']
    #allocation8 [shape = 'u8[65536]{0}', space=vmem, size = 0x10000, scoped, tag = 'input window, operand 5, single buffered']
    #allocation9 [shape = 's32[1]{0}', space=sflag, size = 0x4, scoped, tag = 'scoped memory for tpu_custom_call.1']
    #allocation10 [shape = 'u8[65536]{0}', space=vmem, size = 0x10000, scoped, tag = 'input window, operand 7, single buffered']
    #allocation11 [shape = 'u8[4096]{0}', space=vmem, size = 0x1000, scoped, tag = 'output window, operand 0, single buffered']
    %14 = vsyncpa [#allocation3], 0
    %15 = vsyncpa [#allocation6], 0
    %16 = vsyncpa [#allocation9], 0
    %17 = vsyncpa [#allocation4], 0
    // Predicated region
    $region2: #{tpu_custom_call.1} parent=1 // pred_check
      _
    $region3: #{tpu_custom_call.1} parent=1 // pred_check_branch
      %19 = sbr.rel (0) target = $region5
    $region4: #{tpu_custom_call.1} parent=1 // pred_region
      %21 = vsyncadd [#allocation3], 0
      %s23 = sshll.u32 %s0, 4
      %s24 = int_to_ptr.hbm [resolvable:$true] %s23
      %s25 = sshll.u32 [#allocation2], 4
      %s26 = int_to_ptr.vmem [resolvable:$true] %s25
      %28 = dma.hbm_to_vmem [thread:$0]  %s24, 128, %s26, [#allocation3]
    $region5: #{tpu_custom_call.1} parent=1 // pred_fallthru
      _
    // Predicated region
    $region6: #{tpu_custom_call.1} parent=1 // pred_check
      _
    $region7: #{tpu_custom_call.1} parent=1 // pred_check_branch
      %30 = sbr.rel (0) target = $region9
    $region8: #{tpu_custom_call.1} parent=1 // pred_region
      %32 = vsyncadd [#allocation6], 0
      %s33 = sshll.u32 %s1, 4
      %s34 = int_to_ptr.hbm [resolvable:$true] %s33
      %s35 = sshll.u32 [#allocation5], 4
      %s36 = int_to_ptr.vmem [resolvable:$true] %s35
      %41 = dma.hbm_to_vmem [thread:$0]  %s34, 512, %s36, [#allocation6], 128, 128, 8
    $region9: #{tpu_custom_call.1} parent=1 // pred_fallthru
      _
    // Predicated region
    $region10: #{tpu_custom_call.1} parent=1 // pred_check
      _
    $region11: #{tpu_custom_call.1} parent=1 // pred_check_branch
      %43 = sbr.rel (0) target = $region13
    $region12: #{tpu_custom_call.1} parent=1 // pred_region
      _
    $region13: #{tpu_custom_call.1} parent=1 // pred_fallthru
      _
    // Predicated region
    $region14: #{tpu_custom_call.1} parent=1 // pred_check
      _
    $region15: #{tpu_custom_call.1} parent=1 // pred_check_branch
      %45 = sbr.rel (0) target = $region17
    $region16: #{tpu_custom_call.1} parent=1 // pred_region
      %47 = vsyncadd [#allocation6], 0
      %s48 = sshll.u32 %s3, 4
      %s49 = int_to_ptr.hbm [resolvable:$true] %s48
      %s50 = sshll.u32 [#allocation7], 4
      %s51 = int_to_ptr.vmem [resolvable:$true] %s50
      %56 = dma.hbm_to_vmem [thread:$0]  %s49, 2048, %s51, [#allocation6], 128, 128, 8
    $region17: #{tpu_custom_call.1} parent=1 // pred_fallthru
      _
    // Predicated region
    $region18: #{tpu_custom_call.1} parent=1 // pred_check
      _
    $region19: #{tpu_custom_call.1} parent=1 // pred_check_branch
      %58 = sbr.rel (0) target = $region21
    $region20: #{tpu_custom_call.1} parent=1 // pred_region
      _
    $region21: #{tpu_custom_call.1} parent=1 // pred_fallthru
      _
    // Predicated region
    $region22: #{tpu_custom_call.1} parent=1 // pred_check
      _
    $region23: #{tpu_custom_call.1} parent=1 // pred_check_branch
      %60 = sbr.rel (0) target = $region25
    $region24: #{tpu_custom_call.1} parent=1 // pred_region
      %62 = vsyncadd [#allocation9], 0
      %s63 = sshll.u32 %s5, 4
      %s64 = int_to_ptr.hbm [resolvable:$true] %s63
      %s65 = sshll.u32 [#allocation8], 4
      %s66 = int_to_ptr.vmem [resolvable:$true] %s65
      %71 = dma.hbm_to_vmem [thread:$0]  %s64, 2048, %s66, [#allocation9], 128, 128, 8
    $region25: #{tpu_custom_call.1} parent=1 // pred_fallthru
      _
    // Predicated region
    $region26: #{tpu_custom_call.1} parent=1 // pred_check
      _
    $region27: #{tpu_custom_call.1} parent=1 // pred_check_branch
      %73 = sbr.rel (0) target = $region29
    $region28: #{tpu_custom_call.1} parent=1 // pred_region
      _
    $region29: #{tpu_custom_call.1} parent=1 // pred_fallthru
      _
    // Predicated region
    $region30: #{tpu_custom_call.1} parent=1 // pred_check
      _
    $region31: #{tpu_custom_call.1} parent=1 // pred_check_branch
      %75 = sbr.rel (0) target = $region33
    $region32: #{tpu_custom_call.1} parent=1 // pred_region
      %77 = vsyncadd [#allocation9], 0
      %s78 = sshll.u32 %s7, 4
      %s79 = int_to_ptr.hbm [resolvable:$true] %s78
      %s80 = sshll.u32 [#allocation10], 4
      %s81 = int_to_ptr.vmem [resolvable:$true] %s80
      %86 = dma.hbm_to_vmem [thread:$0]  %s79, 2048, %s81, [#allocation9], 128, 128, 8
    $region33: #{tpu_custom_call.1} parent=1 // pred_fallthru
      _
    // Predicated region
    $region34: #{tpu_custom_call.1} parent=1 // pred_check
      _
    $region35: #{tpu_custom_call.1} parent=1 // pred_check_branch
      %88 = sbr.rel (0) target = $region37
    $region36: #{tpu_custom_call.1} parent=1 // pred_region
      _
    $region37: #{tpu_custom_call.1} parent=1 // pred_fallthru
      _
    // Predicated region
    $region38: #{tpu_custom_call.1} parent=1 // pred_check
      _
    $region39: #{tpu_custom_call.1} parent=1 // pred_check_branch
      %90 = sbr.rel (0) target = $region41
    $region40: #{tpu_custom_call.1} parent=1 // pred_region
      %92 = dma.done [#allocation3], 128
    $region41: #{tpu_custom_call.1} parent=1 // pred_fallthru
      _
    // Predicated region
    $region42: #{tpu_custom_call.1} parent=1 // pred_check
      _
    $region43: #{tpu_custom_call.1} parent=1 // pred_check_branch
      %94 = sbr.rel (0) target = $region45
    $region44: #{tpu_custom_call.1} parent=1 // pred_region
      %96 = dma.done [#allocation6], 512
    $region45: #{tpu_custom_call.1} parent=1 // pred_fallthru
      _
    // Predicated region
    $region46: #{tpu_custom_call.1} parent=1 // pred_check
      _
    $region47: #{tpu_custom_call.1} parent=1 // pred_check_branch
      %98 = sbr.rel (0) target = $region49
    $region48: #{tpu_custom_call.1} parent=1 // pred_region
      %100 = dma.done [#allocation6], 2048
    $region49: #{tpu_custom_call.1} parent=1 // pred_fallthru
      _
    // Predicated region
    $region50: #{tpu_custom_call.1} parent=1 // pred_check
      _
    $region51: #{tpu_custom_call.1} parent=1 // pred_check_branch
      %102 = sbr.rel (0) target = $region53
    $region52: #{tpu_custom_call.1} parent=1 // pred_region
      %104 = dma.done [#allocation9], 2048
    $region53: #{tpu_custom_call.1} parent=1 // pred_fallthru
      _
    // Predicated region
    $region54: #{tpu_custom_call.1} parent=1 // pred_check
      _
    $region55: #{tpu_custom_call.1} parent=1 // pred_check_branch
      %106 = sbr.rel (0) target = $region57
    $region56: #{tpu_custom_call.1} parent=1 // pred_region
      %108 = dma.done [#allocation9], 2048
    $region57: #{tpu_custom_call.1} parent=1 // pred_fallthru
      _
    %v109 = vld [vmem:[#allocation2] sm:$0xff]
    %v110 = vld [vmem:[#allocation5] sm:$0xff]
    %v111 = vld [vmem:[#allocation5 + $0x8] sm:$0xff]
    %v112 = vld [vmem:[#allocation5 + $0x10] sm:$0xff]
    %v113 = vld [vmem:[#allocation5 + $0x18] sm:$0xff]
    %v114 = vld [vmem:[%s2] sm:$0x1]
    %v116 = vperm.slane %v114, 0
    %vm118 = vcmask 261120
    %v120 = vsel %vm118, %v109, 0
    %122 = vmatpush.msra.mxu0 0.0
    %123 = vmatpush.msra.mxu0 0.0
    %124 = vmatpush.msra.mxu0 0.0
    %125 = vmatpush.msra.mxu0 0.0
    %126 = vmatpush.msra.mxu0 0.0
    %127 = vmatpush.msra.mxu0 0.0
    %128 = vmatpush.msra.mxu0 0.0
    %129 = vmatpush.msra.mxu0 0.0
    %130 = vmatpush.msra.mxu0 0.0
    %131 = vmatpush.msra.mxu0 0.0
    %132 = vmatpush.msra.mxu0 0.0
    %133 = vmatpush.msra.mxu0 0.0
    %134 = vmatpush.msra.mxu0 %v113
    %135 = vmatpush.msra.mxu0 %v112
    %136 = vmatpush.msra.mxu0 %v111
    %137 = vmatpush.msra.mxu0 %v110
    %138 = vmatmul.f32.gmra.mxu0 %v120
    %v139 = vpop.f32.mrf.mxu0
    %v140 = vadd.f32 %v116, %v139
    %141 = vdwg.mxu0
    %v142 = vmax.f32 %v140, 0.0
    %v143 = vld [vmem:[#allocation7] sm:$0xff]
    %v144 = vld [vmem:[#allocation7 + $0x8] sm:$0xff]
    %v145 = vld [vmem:[#allocation7 + $0x10] sm:$0xff]
    %v146 = vld [vmem:[#allocation7 + $0x18] sm:$0xff]
    %v147 = vld [vmem:[#allocation7 + $0x20] sm:$0xff]
    %v148 = vld [vmem:[#allocation7 + $0x28] sm:$0xff]
    %v149 = vld [vmem:[#allocation7 + $0x30] sm:$0xff]
    %v150 = vld [vmem:[#allocation7 + $0x38] sm:$0xff]
    %v151 = vld [vmem:[#allocation7 + $0x40] sm:$0xff]
    %v152 = vld [vmem:[#allocation7 + $0x48] sm:$0xff]
    %v153 = vld [vmem:[#allocation7 + $0x50] sm:$0xff]
    %v154 = vld [vmem:[#allocation7 + $0x58] sm:$0xff]
    %v155 = vld [vmem:[#allocation7 + $0x60] sm:$0xff]
    %v156 = vld [vmem:[#allocation7 + $0x68] sm:$0xff]
    %v157 = vld [vmem:[#allocation7 + $0x70] sm:$0xff]
    %v158 = vld [vmem:[#allocation7 + $0x78] sm:$0xff]
    %v159 = vld [vmem:[%s4] sm:$0x1]
    %v161 = vperm.slane %v159, 0
    %163 = vmatpush.msra.mxu0 %v158
    %164 = vmatpush.msra.mxu0 %v157
    %165 = vmatpush.msra.mxu0 %v156
    %166 = vmatpush.msra.mxu0 %v155
    %167 = vmatpush.msra.mxu0 %v154
    %168 = vmatpush.msra.mxu0 %v153
    %169 = vmatpush.msra.mxu0 %v152
    %170 = vmatpush.msra.mxu0 %v151
    %171 = vmatpush.msra.mxu0 %v150
    %172 = vmatpush.msra.mxu0 %v149
    %173 = vmatpush.msra.mxu0 %v148
    %174 = vmatpush.msra.mxu0 %v147
    %175 = vmatpush.msra.mxu0 %v146
    %176 = vmatpush.msra.mxu0 %v145
    %177 = vmatpush.msra.mxu0 %v144
    %178 = vmatpush.msra.mxu0 %v143
    %179 = vmatmul.f32.gmra.mxu0 %v142
    %v180 = vpop.f32.mrf.mxu0
    %v181 = vadd.f32 %v161, %v180
    %182 = vdwg.mxu0
    %v183 = vmax.f32 %v181, 0.0
    %v184 = vld [vmem:[#allocation8] sm:$0xff]
    %v185 = vld [vmem:[#allocation8 + $0x8] sm:$0xff]
    %v186 = vld [vmem:[#allocation8 + $0x10] sm:$0xff]
    %v187 = vld [vmem:[#allocation8 + $0x18] sm:$0xff]
    %v188 = vld [vmem:[#allocation8 + $0x20] sm:$0xff]
    %v189 = vld [vmem:[#allocation8 + $0x28] sm:$0xff]
    %v190 = vld [vmem:[#allocation8 + $0x30] sm:$0xff]
    %v191 = vld [vmem:[#allocation8 + $0x38] sm:$0xff]
    %v192 = vld [vmem:[#allocation8 + $0x40] sm:$0xff]
    %v193 = vld [vmem:[#allocation8 + $0x48] sm:$0xff]
    %v194 = vld [vmem:[#allocation8 + $0x50] sm:$0xff]
    %v195 = vld [vmem:[#allocation8 + $0x58] sm:$0xff]
    %v196 = vld [vmem:[#allocation8 + $0x60] sm:$0xff]
    %v197 = vld [vmem:[#allocation8 + $0x68] sm:$0xff]
    %v198 = vld [vmem:[#allocation8 + $0x70] sm:$0xff]
    %v199 = vld [vmem:[#allocation8 + $0x78] sm:$0xff]
    %v200 = vld [vmem:[%s6] sm:$0x1]
    %v202 = vperm.slane %v200, 0
    %204 = vmatpush.msra.mxu0 %v199
    %205 = vmatpush.msra.mxu0 %v198
    %206 = vmatpush.msra.mxu0 %v197
    %207 = vmatpush.msra.mxu0 %v196
    %208 = vmatpush.msra.mxu0 %v195
    %209 = vmatpush.msra.mxu0 %v194
    %210 = vmatpush.msra.mxu0 %v193
    %211 = vmatpush.msra.mxu0 %v192
    %212 = vmatpush.msra.mxu0 %v191
    %213 = vmatpush.msra.mxu0 %v190
    %214 = vmatpush.msra.mxu0 %v189
    %215 = vmatpush.msra.mxu0 %v188
    %216 = vmatpush.msra.mxu0 %v187
    %217 = vmatpush.msra.mxu0 %v186
    %218 = vmatpush.msra.mxu0 %v185
    %219 = vmatpush.msra.mxu0 %v184
    %220 = vmatmul.f32.gmra.mxu0 %v183
    %v221 = vpop.f32.mrf.mxu0
    %v222 = vadd.f32 %v202, %v221
    %223 = vdwg.mxu0
    %v224 = vmax.f32 %v222, 0.0
    %v225 = vld [vmem:[#allocation10] sm:$0xff]
    %v226 = vld [vmem:[#allocation10 + $0x8] sm:$0xff]
    %v227 = vld [vmem:[#allocation10 + $0x10] sm:$0xff]
    %v228 = vld [vmem:[#allocation10 + $0x18] sm:$0xff]
    %v229 = vld [vmem:[#allocation10 + $0x20] sm:$0xff]
    %v230 = vld [vmem:[#allocation10 + $0x28] sm:$0xff]
    %v231 = vld [vmem:[#allocation10 + $0x30] sm:$0xff]
    %v232 = vld [vmem:[#allocation10 + $0x38] sm:$0xff]
    %v233 = vld [vmem:[#allocation10 + $0x40] sm:$0xff]
    %v234 = vld [vmem:[#allocation10 + $0x48] sm:$0xff]
    %v235 = vld [vmem:[#allocation10 + $0x50] sm:$0xff]
    %v236 = vld [vmem:[#allocation10 + $0x58] sm:$0xff]
    %v237 = vld [vmem:[#allocation10 + $0x60] sm:$0xff]
    %v238 = vld [vmem:[#allocation10 + $0x68] sm:$0xff]
    %v239 = vld [vmem:[#allocation10 + $0x70] sm:$0xff]
    %v240 = vld [vmem:[#allocation10 + $0x78] sm:$0xff]
    %v241 = vld [vmem:[%s8] sm:$0x1]
    %v243 = vperm.slane %v241, 0
    %245 = vmatpush.msra.mxu0 %v240
    %246 = vmatpush.msra.mxu0 %v239
    %247 = vmatpush.msra.mxu0 %v238
    %248 = vmatpush.msra.mxu0 %v237
    %249 = vmatpush.msra.mxu0 %v236
    %250 = vmatpush.msra.mxu0 %v235
    %251 = vmatpush.msra.mxu0 %v234
    %252 = vmatpush.msra.mxu0 %v233
    %253 = vmatpush.msra.mxu0 %v232
    %254 = vmatpush.msra.mxu0 %v231
    %255 = vmatpush.msra.mxu0 %v230
    %256 = vmatpush.msra.mxu0 %v229
    %257 = vmatpush.msra.mxu0 %v228
    %258 = vmatpush.msra.mxu0 %v227
    %259 = vmatpush.msra.mxu0 %v226
    %260 = vmatpush.msra.mxu0 %v225
    %261 = vmatmul.f32.gmra.mxu0 %v224
    %v262 = vpop.f32.mrf.mxu0
    %v263 = vadd.f32 %v243, %v262
    %264 = vdwg.mxu0
    %v265 = vtanh.pop %v263
    %266 = vst [vmem:[#allocation11] sm:$0xff] %v265
    // Predicated region
    $region58: #{tpu_custom_call.1} parent=1 // pred_check
      _
    $region59: #{tpu_custom_call.1} parent=1 // pred_check_branch
      %268 = sbr.rel (0) target = $region61
    $region60: #{tpu_custom_call.1} parent=1 // pred_region
      %270 = vsyncadd [#allocation4], 0
      %s272 = sshll.u32 [#allocation11], 4
      %s273 = int_to_ptr.vmem [resolvable:$true] %s272
      %s274 = sshll.u32 %s9, 4
      %s275 = int_to_ptr.hbm [resolvable:$true] %s274
      %277 = dma.vmem_to_hbm [thread:$0]  %s273, 128, %s275, [#allocation4]
    $region61: #{tpu_custom_call.1} parent=1 // pred_fallthru
      _
    // Predicated region
    $region62: #{tpu_custom_call.1} parent=1 // pred_check
      _
    $region63: #{tpu_custom_call.1} parent=1 // pred_check_branch
      %279 = sbr.rel (0) target = $region65
    $region64: #{tpu_custom_call.1} parent=1 // pred_region
      %281 = dma.done [#allocation4], 128
    $region65: #{tpu_custom_call.1} parent=1 // pred_fallthru
      _
    %282 = vsyncpa [#allocation3], 1
    %283 = vsyncpa [#allocation6], 1
    %284 = vsyncpa [#allocation9], 1
    %285 = vsyncpa [#allocation4], 1

</llo_original>
